<compile_context>
chip_gen: v7x
topology: tpu7x:2x2x1
jax: 0.10.0
libtpu: 0.0.40
codegen_flags: <defaults>
</compile_context>

<pallas_src>
import jax
import jax.numpy as jnp
import numpy as np
from jax.experimental import pallas as pl
from jax.experimental.pallas import tpu as pltpu


# --------------------------------------------------------------------------
# small helpers
# --------------------------------------------------------------------------
def _ru(x, m):
    """Round x up to a multiple of m."""
    return ((x + m - 1) // m) * m


def _pad2d(a, rows, cols):
    """Zero-pad a 2-D array up to (rows, cols)."""
    return jnp.pad(a, ((0, rows - a.shape[0]), (0, cols - a.shape[1])))


def _dm_coeffs(time_steps, ax, bx, dt):
    """Trace-time (float64 numpy) coefficients of the DM rollout.

    The semi-implicit Euler rollout is linear in (x0, goal, force_0..force_{T-1}),
    so express x after step t as
        x_t = cx0[t]*x0 + cg[t]*goal + sum_s gf[t, s]*force_s
    by running the *exact same* update loop on coefficient vectors.
    """
    nvar = 2 + time_steps                 # [x0, goal, f_0 .. f_{T-1}]
    x = np.zeros(nvar, np.float64)
    x[0] = 1.0
    dx = np.zeros(nvar, np.float64)
    g = np.zeros(nvar, np.float64)
    g[1] = 1.0
    rows = []
    for i in range(time_steps):
        f = np.zeros(nvar, np.float64)
        f[2 + i] = 1.0
        ddx = ax * (bx * (g - x) - dx) + f
        dx = dx + ddx * dt
        x = x + dx * dt
        rows.append(x.copy())
    coeff = np.stack(rows)                # (T, 2+T)
    return coeff[:, 0], coeff[:, 1], coeff[:, 2:]   # cx0 (T,), cg (T,), gf (T, T)


# --------------------------------------------------------------------------
# Fused kernel: decoder MLP -> sigmoid -> (denorm + DM rollout) as one matmul chain
# --------------------------------------------------------------------------
def _trajgen_kernel(zy_ref, w1_ref, b1_ref, w2_ref, b2_ref, w3_ref, b3_ref,
                    m_ref, bias_ref, out_ref):
    f32 = jnp.float32
    h1 = jnp.dot(zy_ref[...], w1_ref[...], preferred_element_type=f32) + b1_ref[...]
    h1 = jnp.maximum(h1, 0.0)
    h2 = jnp.dot(h1, w2_ref[...], preferred_element_type=f32) + b2_ref[...]
    h2 = jnp.maximum(h2, 0.0)
    h3 = jnp.dot(h2, w3_ref[...], preferred_element_type=f32) + b3_ref[...]
    # sigmoid: exp on the EUP slot, approximate EUP reciprocal for the divide
    sig = pl.reciprocal(1.0 + jnp.exp(-h3), approx=True)
    # folded (denorm + DM rollout) affine map: one more MXU matmul + bias
    out_ref[...] = jnp.dot(sig, m_ref[...], preferred_element_type=f32) + bias_ref[...]


def _trajgen_pallas(zy_p, w1_p, b1_p, w2_p, b2_p, w3_p, b3_p, m_p, bias_p, bb):
    bp, din_p = zy_p.shape
    dout_p = m_p.shape[1]
    row_blk = lambda i: (i, 0)      # batch-tiled operands
    rep_blk = lambda i: (0, 0)      # weights: same block every grid step (stay resident)
    return pl.pallas_call(
        _trajgen_kernel,
        out_shape=jax.ShapeDtypeStruct((bp, dout_p), jnp.float32),
        grid_spec=pltpu.PrefetchScalarGridSpec(
            num_scalar_prefetch=0,
            grid=(bp // bb,),
            in_specs=[
                pl.BlockSpec((bb, din_p), row_blk),
                pl.BlockSpec(w1_p.shape, rep_blk),
                pl.BlockSpec(b1_p.shape, rep_blk),
                pl.BlockSpec(w2_p.shape, rep_blk),
                pl.BlockSpec(b2_p.shape, rep_blk),
                pl.BlockSpec(w3_p.shape, rep_blk),
                pl.BlockSpec(b3_p.shape, rep_blk),
                pl.BlockSpec(m_p.shape, rep_blk),
                pl.BlockSpec(bias_p.shape, rep_blk),
            ],
            out_specs=pl.BlockSpec((bb, dout_p), row_blk),
        ),
        compiler_params=pltpu.CompilerParams(
            dimension_semantics=("parallel",)),
    )(zy_p, w1_p, b1_p, w2_p, b2_p, w3_p, b3_p, m_p, bias_p)


# --------------------------------------------------------------------------
# Parameter init (deterministic, mirrors nn.Linear / nn.Embedding shapes)
# --------------------------------------------------------------------------
def init_params(key, n_dof, time_steps, nhid, ncond, nclass):
    dim = n_dof * nhid
    d_in = dim + ncond
    ks = jax.random.split(key, 4)

    def lin(k, fan_in, fan_out):
        kw, kb = jax.random.split(k)
        lim = 1.0 / np.sqrt(fan_in)
        w = jax.random.uniform(kw, (fan_in, fan_out), jnp.float32, -lim, lim)
        b = jax.random.uniform(kb, (1, fan_out), jnp.float32, -lim, lim)
        return w, b

    w1, b1 = lin(ks[0], d_in, 64)
    w2, b2 = lin(ks[1], 64, 128)
    w3, b3 = lin(ks[2], 128, time_steps * n_dof)
    emb = jax.random.normal(ks[3], (nclass, ncond), jnp.float32)
    return dict(emb=emb, w1=w1, b1=b1, w2=w2, b2=b2, w3=w3, b3=b3)


# --------------------------------------------------------------------------
# TrajGen.forward  (d_type='new' path of generator())
# --------------------------------------------------------------------------
def trajgen_forward(params, class_idx, x0, goal, z, min_vec, max_vec,
                    n_dof, time_steps, ax=25.0, dt=0.01):
    bx = ax / 4.0
    # TODO(synk): torch.randn latent is replaced by a deterministic jax.random normal (z).
    y = params['emb'][class_idx]                        # label embedding (tiny gather, glue)
    zy = jnp.concatenate([z, y], axis=1).astype(jnp.float32)   # (B, dim + ncond)
    B = zy.shape[0]
    dout = n_dof * time_steps
    hi = jax.lax.Precision.HIGHEST

    # ---- trace-time fold: denorm + whole DM rollout -> one (dout, dout) affine map ----
    cx0, cg, gf = _dm_coeffs(time_steps, ax, bx, dt)            # numpy float64 constants
    # block-diagonal over dof, dof-major flat index (col = d*T + t):
    #   M[d*T+s, d*T+t] = gf[t, s]
    m_np = np.kron(np.eye(n_dof), gf.T)                         # (dout, dout)
    m_f32 = jnp.asarray(m_np, jnp.float32)
    scale_flat = jnp.repeat(max_vec - min_vec, time_steps)      # (dout,)  [d*T+t] -> scale[d]
    min_flat = jnp.repeat(min_vec, time_steps)                  # (dout,)
    m_roll = scale_flat[:, None] * m_f32                        # fold denorm scale into M
    bias_roll = (jnp.dot(min_flat, m_f32, precision=hi)         # fold denorm offset through M
                 + (x0[:, None] * jnp.asarray(cx0, jnp.float32)[None, :]
                    + goal[:, None] * jnp.asarray(cg, jnp.float32)[None, :]).reshape(-1))

    # ---- pad everything to (8, 128) granules so all tiles are unmasked / lane-dense ----
    bb = min(128, _ru(B, 8))                  # batch tile (multiple of 8 f32 sublanes)
    bp = _ru(B, bb)
    din_p = _ru(zy.shape[1], 128)
    h1_p = _ru(params['w1'].shape[1], 128)
    h2_p = _ru(params['w2'].shape[1], 128)
    dout_p = _ru(dout, 128)

    zy_p = _pad2d(zy, bp, din_p)
    w1_p = _pad2d(params['w1'], din_p, h1_p)
    b1_p = _pad2d(params['b1'], 1, h1_p)
    w2_p = _pad2d(params['w2'], h1_p, h2_p)
    b2_p = _pad2d(params['b2'], 1, h2_p)
    w3_p = _pad2d(params['w3'], h2_p, dout_p)
    b3_p = _pad2d(params['b3'], 1, dout_p)
    m_p = _pad2d(m_roll, dout_p, dout_p)      # zero rows kill the sigmoid(0)=0.5 pad columns
    bias_p = _pad2d(bias_roll[None, :], 1, dout_p)

    out = _trajgen_pallas(zy_p, w1_p, b1_p, w2_p, b2_p, w3_p, b3_p, m_p, bias_p, bb)
    # dof-major columns (d*T + t) -> the (B, n_dof, T) result is a free reshape
    return out[:B, :dout].reshape(B, n_dof, time_steps)


# --------------------------------------------------------------------------
# Pure-JAX reference (mirrors the PyTorch forward exactly: sequential rollout)
# --------------------------------------------------------------------------
def trajgen_reference(params, class_idx, x0, goal, z, min_vec, max_vec,
                      n_dof, time_steps, ax=25.0, dt=0.01):
    bx = ax / 4.0
    y = params['emb'][class_idx]
    zy = jnp.concatenate([z, y], axis=1)
    h1 = jnp.maximum(zy @ params['w1'] + params['b1'], 0.0)
    h2 = jnp.maximum(h1 @ params['w2'] + params['b2'], 0.0)
    res = jax.nn.sigmoid(h2 @ params['w3'] + params['b3'])
    res = res.reshape(-1, n_dof, time_steps)
    torque = res * (max_vec - min_vec)[None, :, None] + min_vec[None, :, None]
    B = res.shape[0]
    x = jnp.broadcast_to(x0[None, :], (B, n_dof))
    dx = jnp.zeros((B, n_dof), jnp.float32)
    traj = []
    for i in range(time_steps):
        ddx = ax * (bx * (goal[None, :] - x) - dx) + torque[:, :, i]
        dx = dx + ddx * dt
        x = x + dx * dt
        traj.append(x)
    return jnp.stack(traj, axis=-1)


if __name__ == "__main__":
    n_dof, time_steps = 4, 16            # shape = (dof, time_steps)
    nhid, ncond, nclass = 8, 4, 4
    batch = 2
    dim = n_dof * nhid

    key = jax.random.PRNGKey(0)
    k_params, k_z, k_idx = jax.random.split(key, 3)
    params = init_params(k_params, n_dof, time_steps, nhid, ncond, nclass)

    class_idx = jax.random.randint(k_idx, (batch,), 0, nclass)
    z = jax.random.normal(k_z, (batch, dim), jnp.float32)
    x0 = jnp.array([0.1, -0.2, 0.05, 0.0], dtype=jnp.float32)
    goal = jnp.array([0.5, 0.3, -0.4, 0.2], dtype=jnp.float32)
    min_vec = jnp.array([-1.0, -0.5, -2.0, -1.5], dtype=jnp.float32)
    max_vec = jnp.array([1.0, 0.5, 2.0, 1.5], dtype=jnp.float32)

    traj = trajgen_forward(params, class_idx, x0, goal, z, min_vec, max_vec,
                           n_dof, time_steps)
    traj = jax.block_until_ready(traj)

    ref = trajgen_reference(params, class_idx, x0, goal, z, min_vec, max_vec,
                            n_dof, time_steps)
    # slightly relaxed vs. 1e-4: the kernel's sigmoid uses the approximate EUP
    # reciprocal and the rollout is evaluated as an (exact) folded affine map.
    np.testing.assert_allclose(np.asarray(traj), np.asarray(ref),
                               rtol=2e-4, atol=2e-4)
    print("KERNEL_OK")
</pallas_src>

<mosaic_0001>
module attributes {stable_mosaic.version = 11 : i64} {
  func.func @_trajgen_kernel(%arg0: i32, %arg1: memref<8x128xf32, #tpu.memory_space<vmem>>, %arg2: memref<128x128xf32, #tpu.memory_space<vmem>>, %arg3: memref<1x128xf32, #tpu.memory_space<vmem>>, %arg4: memref<128x128xf32, #tpu.memory_space<vmem>>, %arg5: memref<1x128xf32, #tpu.memory_space<vmem>>, %arg6: memref<128x128xf32, #tpu.memory_space<vmem>>, %arg7: memref<1x128xf32, #tpu.memory_space<vmem>>, %arg8: memref<128x128xf32, #tpu.memory_space<vmem>>, %arg9: memref<1x128xf32, #tpu.memory_space<vmem>>, %arg10: memref<8x128xf32, #tpu.memory_space<vmem>>) attributes {dimension_semantics = [#tpu.dimension_semantics<parallel>], iteration_bounds = array<i64: 1>, scalar_prefetch = 0 : i64, scratch_operands = 0 : i64, tpu.core_type = #tpu.core_type<tc>, window_params = [{transform_indices = @transform_0, window_bounds = array<i64: 8, 128>}, {pipeline_mode = #tpu.pipeline_mode<synchronous>, transform_indices = @transform_1, window_bounds = array<i64: 128, 128>}, {pipeline_mode = #tpu.pipeline_mode<synchronous>, transform_indices = @transform_2, window_bounds = array<i64: 1, 128>}, {pipeline_mode = #tpu.pipeline_mode<synchronous>, transform_indices = @transform_3, window_bounds = array<i64: 128, 128>}, {pipeline_mode = #tpu.pipeline_mode<synchronous>, transform_indices = @transform_4, window_bounds = array<i64: 1, 128>}, {pipeline_mode = #tpu.pipeline_mode<synchronous>, transform_indices = @transform_5, window_bounds = array<i64: 128, 128>}, {pipeline_mode = #tpu.pipeline_mode<synchronous>, transform_indices = @transform_6, window_bounds = array<i64: 1, 128>}, {pipeline_mode = #tpu.pipeline_mode<synchronous>, transform_indices = @transform_7, window_bounds = array<i64: 128, 128>}, {pipeline_mode = #tpu.pipeline_mode<synchronous>, transform_indices = @transform_8, window_bounds = array<i64: 1, 128>}, {transform_indices = @transform_9, window_bounds = array<i64: 8, 128>}]} {
    %c0 = arith.constant 0 : index
    %c0_0 = arith.constant 0 : index
    %0 = vector.load %arg1[%c0, %c0_0] : memref<8x128xf32, #tpu.memory_space<vmem>>, vector<8x128xf32>
    %c0_1 = arith.constant 0 : index
    %c0_2 = arith.constant 0 : index
    %1 = vector.load %arg2[%c0_1, %c0_2] : memref<128x128xf32, #tpu.memory_space<vmem>>, vector<128x128xf32>
    %cst = arith.constant dense<0.000000e+00> : vector<8x128xf32>
    %2 = tpu.matmul %0, %1, %cst {dimension_numbers = #tpu.dot_dimension_numbers<[1], [0], [0], [1], [0, 0, 1, 1], [], []>} : vector<8x128xf32>, vector<128x128xf32>, vector<8x128xf32> -> vector<8x128xf32>
    %c0_3 = arith.constant 0 : index
    %c0_4 = arith.constant 0 : index
    %3 = vector.load %arg3[%c0_3, %c0_4] : memref<1x128xf32, #tpu.memory_space<vmem>>, vector<1x128xf32>
    %4 = vector.broadcast %3 : vector<1x128xf32> to vector<8x128xf32>
    %5 = arith.addf %2, %4 : vector<8x128xf32>
    %cst_5 = arith.constant 0.000000e+00 : f32
    %6 = vector.broadcast %cst_5 : f32 to vector<8x128xf32>
    %7 = arith.maximumf %5, %6 : vector<8x128xf32>
    %c0_6 = arith.constant 0 : index
    %c0_7 = arith.constant 0 : index
    %8 = vector.load %arg4[%c0_6, %c0_7] : memref<128x128xf32, #tpu.memory_space<vmem>>, vector<128x128xf32>
    %cst_8 = arith.constant dense<0.000000e+00> : vector<8x128xf32>
    %9 = tpu.matmul %7, %8, %cst_8 {dimension_numbers = #tpu.dot_dimension_numbers<[1], [0], [0], [1], [0, 0, 1, 1], [], []>} : vector<8x128xf32>, vector<128x128xf32>, vector<8x128xf32> -> vector<8x128xf32>
    %c0_9 = arith.constant 0 : index
    %c0_10 = arith.constant 0 : index
    %10 = vector.load %arg5[%c0_9, %c0_10] : memref<1x128xf32, #tpu.memory_space<vmem>>, vector<1x128xf32>
    %11 = vector.broadcast %10 : vector<1x128xf32> to vector<8x128xf32>
    %12 = arith.addf %9, %11 : vector<8x128xf32>
    %cst_11 = arith.constant 0.000000e+00 : f32
    %13 = vector.broadcast %cst_11 : f32 to vector<8x128xf32>
    %14 = arith.maximumf %12, %13 : vector<8x128xf32>
    %c0_12 = arith.constant 0 : index
    %c0_13 = arith.constant 0 : index
    %15 = vector.load %arg6[%c0_12, %c0_13] : memref<128x128xf32, #tpu.memory_space<vmem>>, vector<128x128xf32>
    %cst_14 = arith.constant dense<0.000000e+00> : vector<8x128xf32>
    %16 = tpu.matmul %14, %15, %cst_14 {dimension_numbers = #tpu.dot_dimension_numbers<[1], [0], [0], [1], [0, 0, 1, 1], [], []>} : vector<8x128xf32>, vector<128x128xf32>, vector<8x128xf32> -> vector<8x128xf32>
    %c0_15 = arith.constant 0 : index
    %c0_16 = arith.constant 0 : index
    %17 = vector.load %arg7[%c0_15, %c0_16] : memref<1x128xf32, #tpu.memory_space<vmem>>, vector<1x128xf32>
    %18 = vector.broadcast %17 : vector<1x128xf32> to vector<8x128xf32>
    %19 = arith.addf %16, %18 : vector<8x128xf32>
    %cst_17 = arith.constant 0.000000e+00 : f32
    %20 = vector.broadcast %cst_17 : f32 to vector<8x128xf32>
    %21 = arith.subf %20, %19 : vector<8x128xf32>
    %22 = math.exp %21 : vector<8x128xf32>
    %cst_18 = arith.constant 1.000000e+00 : f32
    %23 = vector.broadcast %cst_18 : f32 to vector<8x128xf32>
    %24 = arith.addf %23, %22 : vector<8x128xf32>
    %25 = tpu.reciprocal %24 {approx = true} : vector<8x128xf32> -> vector<8x128xf32>
    %c0_19 = arith.constant 0 : index
    %c0_20 = arith.constant 0 : index
    %26 = vector.load %arg8[%c0_19, %c0_20] : memref<128x128xf32, #tpu.memory_space<vmem>>, vector<128x128xf32>
    %cst_21 = arith.constant dense<0.000000e+00> : vector<8x128xf32>
    %27 = tpu.matmul %25, %26, %cst_21 {dimension_numbers = #tpu.dot_dimension_numbers<[1], [0], [0], [1], [0, 0, 1, 1], [], []>} : vector<8x128xf32>, vector<128x128xf32>, vector<8x128xf32> -> vector<8x128xf32>
    %c0_22 = arith.constant 0 : index
    %c0_23 = arith.constant 0 : index
    %28 = vector.load %arg9[%c0_22, %c0_23] : memref<1x128xf32, #tpu.memory_space<vmem>>, vector<1x128xf32>
    %29 = vector.broadcast %28 : vector<1x128xf32> to vector<8x128xf32>
    %30 = arith.addf %27, %29 : vector<8x128xf32>
    %c0_24 = arith.constant 0 : index
    %c0_25 = arith.constant 0 : index
    %31 = vector.load %arg10[%c0_24, %c0_25] : memref<8x128xf32, #tpu.memory_space<vmem>>, vector<8x128xf32>
    tpu.vector_store %arg10[%c0_24, %c0_25], %30 {strides = array<i32>} : memref<8x128xf32, #tpu.memory_space<vmem>>, vector<8x128xf32>,
    return
  }
  func.func @transform_0(%arg0: i32) -> (i32, i32) {
    %c0_i32 = arith.constant 0 : i32
    %c0_i32_0 = arith.constant 0 : i32
    return %arg0, %c0_i32 : i32, i32
  }
  func.func @transform_1(%arg0: i32) -> (i32, i32) {
    %c0_i32 = arith.constant 0 : i32
    %c0_i32_0 = arith.constant 0 : i32
    %c0_i32_1 = arith.constant 0 : i32
    return %c0_i32, %c0_i32_0 : i32, i32
  }
  func.func @transform_2(%arg0: i32) -> (i32, i32) {
    %c0_i32 = arith.constant 0 : i32
    %c0_i32_0 = arith.constant 0 : i32
    %c0_i32_1 = arith.constant 0 : i32
    return %c0_i32, %c0_i32_0 : i32, i32
  }
  func.func @transform_3(%arg0: i32) -> (i32, i32) {
    %c0_i32 = arith.constant 0 : i32
    %c0_i32_0 = arith.constant 0 : i32
    %c0_i32_1 = arith.constant 0 : i32
    return %c0_i32, %c0_i32_0 : i32, i32
  }
  func.func @transform_4(%arg0: i32) -> (i32, i32) {
    %c0_i32 = arith.constant 0 : i32
    %c0_i32_0 = arith.constant 0 : i32
    %c0_i32_1 = arith.constant 0 : i32
    return %c0_i32, %c0_i32_0 : i32, i32
  }
  func.func @transform_5(%arg0: i32) -> (i32, i32) {
    %c0_i32 = arith.constant 0 : i32
    %c0_i32_0 = arith.constant 0 : i32
    %c0_i32_1 = arith.constant 0 : i32
    return %c0_i32, %c0_i32_0 : i32, i32
  }
  func.func @transform_6(%arg0: i32) -> (i32, i32) {
    %c0_i32 = arith.constant 0 : i32
    %c0_i32_0 = arith.constant 0 : i32
    %c0_i32_1 = arith.constant 0 : i32
    return %c0_i32, %c0_i32_0 : i32, i32
  }
  func.func @transform_7(%arg0: i32) -> (i32, i32) {
    %c0_i32 = arith.constant 0 : i32
    %c0_i32_0 = arith.constant 0 : i32
    %c0_i32_1 = arith.constant 0 : i32
    return %c0_i32, %c0_i32_0 : i32, i32
  }
  func.func @transform_8(%arg0: i32) -> (i32, i32) {
    %c0_i32 = arith.constant 0 : i32
    %c0_i32_0 = arith.constant 0 : i32
    %c0_i32_1 = arith.constant 0 : i32
    return %c0_i32, %c0_i32_0 : i32, i32
  }
  func.func @transform_9(%arg0: i32) -> (i32, i32) {
    %c0_i32 = arith.constant 0 : i32
    %c0_i32_0 = arith.constant 0 : i32
    return %arg0, %c0_i32 : i32, i32
  }
}

</mosaic_0001>

<llo_original>
// kernel: tpu_custom_call.1
$region0: #{tpu_custom_call.1}
  #allocation0 [shape = 'u32[]', space=smem, size = 0x4, offset = 0x4, fixed_abs, tag = 'smem constant byte address 0x4 - core index']
  #allocation1 [shape = 'u32[144,128]{1,0:T(1,128)}', space=vmem, size = 0x12000, scoped, tag = 'internal scratch']
  %s0 = inlined_call_operand.hbm [shape: f32[8,128], index: 0, kind: input, shape index: {}]
  %s1 = inlined_call_operand.hbm [shape: f32[128,128], index: 1, kind: input, shape index: {}]
  %s2 = inlined_call_operand.vmem [shape: f32[1,128], index: 2, kind: input, shape index: {}]
  %s3 = inlined_call_operand.hbm [shape: f32[128,128], index: 3, kind: input, shape index: {}]
  %s4 = inlined_call_operand.vmem [shape: f32[1,128], index: 4, kind: input, shape index: {}]
  %s5 = inlined_call_operand.hbm [shape: f32[128,128], index: 5, kind: input, shape index: {}]
  %s6 = inlined_call_operand.vmem [shape: f32[1,128], index: 6, kind: input, shape index: {}]
  %s7 = inlined_call_operand.hbm [shape: f32[128,128], index: 7, kind: input, shape index: {}]
  %s8 = inlined_call_operand.vmem [shape: f32[1,128], index: 8, kind: input, shape index: {}]
  %s9 = inlined_call_operand.hbm [shape: f32[8,128], index: 9, kind: output, shape index: {}]
  %s10 = sld [smem:[#allocation0]]
  $region66: #{tpu_custom_call.1} parent=0
    _
  %s12 = ssub.s32 1, %s10
  %s13 = scalar_select 0, %s12, %s10
  $region1: #{tpu_custom_call.1} parent=0
    #allocation2 [shape = 'u8[4096]{0}', space=vmem, size = 0x1000, scoped, tag = 'input window, operand 0, single buffered']
    #allocation3 [shape = 's32[1]{0}', space=sflag, size = 0x4, scoped, tag = 'scoped memory for tpu_custom_call.1']
    #allocation4 [shape = 's32[1]{0}', space=sflag, size = 0x4, scoped, tag = 'scoped memory for tpu_custom_call.1']
    #allocation5 [shape = 'u8[65536]{0}', space=vmem, size = 0x10000, scoped, tag = 'input window, operand 1, single buffered']
    #allocation6 [shape = 's32[1]{0}', space=sflag, size = 0x4, scoped, tag = 'scoped memory for tpu_custom_call.1']
    #allocation7 [shape = 'u8[65536]{0}', space=vmem, size = 0x10000, scoped, tag = 'input window, operand 3, single buffered']
    #allocation8 [shape = 'u8[65536]{0}', space=vmem, size = 0x10000, scoped, tag = 'input window, operand 5, single buffered']
    #allocation9 [shape = 's32[1]{0}', space=sflag, size = 0x4, scoped, tag = 'scoped memory for tpu_custom_call.1']
    #allocation10 [shape = 'u8[65536]{0}', space=vmem, size = 0x10000, scoped, tag = 'input window, operand 7, single buffered']
    #allocation11 [shape = 'u8[4096]{0}', space=vmem, size = 0x1000, scoped, tag = 'output window, operand 0, single buffered']
    %14 = vsyncpa [#allocation3], 0
    %15 = vsyncpa [#allocation6], 0
    %16 = vsyncpa [#allocation9], 0
    %17 = vsyncpa [#allocation4], 0
    // Predicated region
    $region2: #{tpu_custom_call.1} parent=1 // pred_check
      _
    $region3: #{tpu_custom_call.1} parent=1 // pred_check_branch
      %19 = sbr.rel (0) target = $region5
    $region4: #{tpu_custom_call.1} parent=1 // pred_region
      %s21 = ssub.s32 128, 128
      %22 = vsyncadd [#allocation3], %s21
      %s24 = sshll.u32 [#allocation2], 4
      %s25 = int_to_ptr.vmem [resolvable:$true] %s24
      %27 = dma.hbm_to_vmem [thread:$0]  %s0, 128, %s25, [#allocation3]
    $region5: #{tpu_custom_call.1} parent=1 // pred_fallthru
      _
    // Predicated region
    $region6: #{tpu_custom_call.1} parent=1 // pred_check
      _
    $region7: #{tpu_custom_call.1} parent=1 // pred_check_branch
      %29 = sbr.rel (0) target = $region9
    $region8: #{tpu_custom_call.1} parent=1 // pred_region
      %s31 = ssub.s32 2048, 2048
      %32 = vsyncadd [#allocation6], %s31
      %s33 = sshll.u32 [#allocation5], 4
      %s34 = int_to_ptr.vmem [resolvable:$true] %s33
      %39 = dma.hbm_to_vmem [thread:$0]  %s1, 2048, %s34, [#allocation6], 128, 128, 8
    $region9: #{tpu_custom_call.1} parent=1 // pred_fallthru
      _
    // Predicated region
    $region10: #{tpu_custom_call.1} parent=1 // pred_check
      _
    $region11: #{tpu_custom_call.1} parent=1 // pred_check_branch
      %41 = sbr.rel (0) target = $region13
    $region12: #{tpu_custom_call.1} parent=1 // pred_region
      _
    $region13: #{tpu_custom_call.1} parent=1 // pred_fallthru
      _
    // Predicated region
    $region14: #{tpu_custom_call.1} parent=1 // pred_check
      _
    $region15: #{tpu_custom_call.1} parent=1 // pred_check_branch
      %43 = sbr.rel (0) target = $region17
    $region16: #{tpu_custom_call.1} parent=1 // pred_region
      %s45 = ssub.s32 2048, 2048
      %46 = vsyncadd [#allocation6], %s45
      %s47 = sshll.u32 [#allocation7], 4
      %s48 = int_to_ptr.vmem [resolvable:$true] %s47
      %53 = dma.hbm_to_vmem [thread:$0]  %s3, 2048, %s48, [#allocation6], 128, 128, 8
    $region17: #{tpu_custom_call.1} parent=1 // pred_fallthru
      _
    // Predicated region
    $region18: #{tpu_custom_call.1} parent=1 // pred_check
      _
    $region19: #{tpu_custom_call.1} parent=1 // pred_check_branch
      %55 = sbr.rel (0) target = $region21
    $region20: #{tpu_custom_call.1} parent=1 // pred_region
      _
    $region21: #{tpu_custom_call.1} parent=1 // pred_fallthru
      _
    // Predicated region
    $region22: #{tpu_custom_call.1} parent=1 // pred_check
      _
    $region23: #{tpu_custom_call.1} parent=1 // pred_check_branch
      %57 = sbr.rel (0) target = $region25
    $region24: #{tpu_custom_call.1} parent=1 // pred_region
      %s59 = ssub.s32 2048, 2048
      %60 = vsyncadd [#allocation9], %s59
      %s61 = sshll.u32 [#allocation8], 4
      %s62 = int_to_ptr.vmem [resolvable:$true] %s61
      %67 = dma.hbm_to_vmem [thread:$0]  %s5, 2048, %s62, [#allocation9], 128, 128, 8
    $region25: #{tpu_custom_call.1} parent=1 // pred_fallthru
      _
    // Predicated region
    $region26: #{tpu_custom_call.1} parent=1 // pred_check
      _
    $region27: #{tpu_custom_call.1} parent=1 // pred_check_branch
      %69 = sbr.rel (0) target = $region29
    $region28: #{tpu_custom_call.1} parent=1 // pred_region
      _
    $region29: #{tpu_custom_call.1} parent=1 // pred_fallthru
      _
    // Predicated region
    $region30: #{tpu_custom_call.1} parent=1 // pred_check
      _
    $region31: #{tpu_custom_call.1} parent=1 // pred_check_branch
      %71 = sbr.rel (0) target = $region33
    $region32: #{tpu_custom_call.1} parent=1 // pred_region
      %s73 = ssub.s32 2048, 2048
      %74 = vsyncadd [#allocation9], %s73
      %s75 = sshll.u32 [#allocation10], 4
      %s76 = int_to_ptr.vmem [resolvable:$true] %s75
      %81 = dma.hbm_to_vmem [thread:$0]  %s7, 2048, %s76, [#allocation9], 128, 128, 8
    $region33: #{tpu_custom_call.1} parent=1 // pred_fallthru
      _
    // Predicated region
    $region34: #{tpu_custom_call.1} parent=1 // pred_check
      _
    $region35: #{tpu_custom_call.1} parent=1 // pred_check_branch
      %83 = sbr.rel (0) target = $region37
    $region36: #{tpu_custom_call.1} parent=1 // pred_region
      _
    $region37: #{tpu_custom_call.1} parent=1 // pred_fallthru
      _
    // Predicated region
    $region38: #{tpu_custom_call.1} parent=1 // pred_check
      _
    $region39: #{tpu_custom_call.1} parent=1 // pred_check_branch
      %85 = sbr.rel (0) target = $region41
    $region40: #{tpu_custom_call.1} parent=1 // pred_region
      %86 = dma.done [#allocation3], 128
    $region41: #{tpu_custom_call.1} parent=1 // pred_fallthru
      _
    // Predicated region
    $region42: #{tpu_custom_call.1} parent=1 // pred_check
      _
    $region43: #{tpu_custom_call.1} parent=1 // pred_check_branch
      %88 = sbr.rel (0) target = $region45
    $region44: #{tpu_custom_call.1} parent=1 // pred_region
      %89 = dma.done [#allocation6], 2048
    $region45: #{tpu_custom_call.1} parent=1 // pred_fallthru
      _
    // Predicated region
    $region46: #{tpu_custom_call.1} parent=1 // pred_check
      _
    $region47: #{tpu_custom_call.1} parent=1 // pred_check_branch
      %91 = sbr.rel (0) target = $region49
    $region48: #{tpu_custom_call.1} parent=1 // pred_region
      %92 = dma.done [#allocation6], 2048
    $region49: #{tpu_custom_call.1} parent=1 // pred_fallthru
      _
    // Predicated region
    $region50: #{tpu_custom_call.1} parent=1 // pred_check
      _
    $region51: #{tpu_custom_call.1} parent=1 // pred_check_branch
      %94 = sbr.rel (0) target = $region53
    $region52: #{tpu_custom_call.1} parent=1 // pred_region
      %95 = dma.done [#allocation9], 2048
    $region53: #{tpu_custom_call.1} parent=1 // pred_fallthru
      _
    // Predicated region
    $region54: #{tpu_custom_call.1} parent=1 // pred_check
      _
    $region55: #{tpu_custom_call.1} parent=1 // pred_check_branch
      %97 = sbr.rel (0) target = $region57
    $region56: #{tpu_custom_call.1} parent=1 // pred_region
      %98 = dma.done [#allocation9], 2048
    $region57: #{tpu_custom_call.1} parent=1 // pred_fallthru
      _
    %v99 = vld [vmem:[#allocation2] sm:$0xff]
    %v100 = vld [vmem:[#allocation5] sm:$0xff]
    %v101 = vld [vmem:[#allocation5 + $0x8] sm:$0xff]
    %v102 = vld [vmem:[#allocation5 + $0x10] sm:$0xff]
    %v103 = vld [vmem:[#allocation5 + $0x18] sm:$0xff]
    %v104 = vld [vmem:[#allocation5 + $0x20] sm:$0xff]
    %v105 = vld [vmem:[#allocation5 + $0x28] sm:$0xff]
    %v106 = vld [vmem:[#allocation5 + $0x30] sm:$0xff]
    %v107 = vld [vmem:[#allocation5 + $0x38] sm:$0xff]
    %v108 = vld [vmem:[#allocation5 + $0x40] sm:$0xff]
    %v109 = vld [vmem:[#allocation5 + $0x48] sm:$0xff]
    %v110 = vld [vmem:[#allocation5 + $0x50] sm:$0xff]
    %v111 = vld [vmem:[#allocation5 + $0x58] sm:$0xff]
    %v112 = vld [vmem:[#allocation5 + $0x60] sm:$0xff]
    %v113 = vld [vmem:[#allocation5 + $0x68] sm:$0xff]
    %v114 = vld [vmem:[#allocation5 + $0x70] sm:$0xff]
    %v115 = vld [vmem:[#allocation5 + $0x78] sm:$0xff]
    %v116 = vld [vmem:[%s2] sm:$0x1]
    %v118 = vlaneseq
    %v119 = vshrl.u32 %v118, 7
    %v120 = vsub.s32 0, %v119
    %v121 = vrot.slane %v116, %v120
    %123 = vmatprep.subr.mxu0 0.0
    %124 = vmatpush1.msra.mxu0 %v100
    %125 = vmatprep.subr.mxu0 0.0
    %126 = vmatpush1.msra.mxu0 %v101
    %127 = vmatprep.subr.mxu0 0.0
    %128 = vmatpush1.msra.mxu0 %v102
    %129 = vmatprep.subr.mxu0 0.0
    %130 = vmatpush1.msra.mxu0 %v103
    %131 = vmatprep.subr.mxu0 0.0
    %132 = vmatpush1.msra.mxu0 %v104
    %133 = vmatprep.subr.mxu0 0.0
    %134 = vmatpush1.msra.mxu0 %v105
    %135 = vmatprep.subr.mxu0 0.0
    %136 = vmatpush1.msra.mxu0 %v106
    %137 = vmatprep.subr.mxu0 0.0
    %138 = vmatpush1.msra.mxu0 %v107
    %139 = vmatprep.subr.mxu0 0.0
    %140 = vmatpush1.msra.mxu0 %v108
    %141 = vmatprep.subr.mxu0 0.0
    %142 = vmatpush1.msra.mxu0 %v109
    %143 = vmatprep.subr.mxu0 0.0
    %144 = vmatpush1.msra.mxu0 %v110
    %145 = vmatprep.subr.mxu0 0.0
    %146 = vmatpush1.msra.mxu0 %v111
    %147 = vmatprep.subr.mxu0 0.0
    %148 = vmatpush1.msra.mxu0 %v112
    %149 = vmatprep.subr.mxu0 0.0
    %150 = vmatpush1.msra.mxu0 %v113
    %151 = vmatprep.subr.mxu0 0.0
    %152 = vmatpush1.msra.mxu0 %v114
    %153 = vmatprep.subr.mxu0 0.0
    %154 = vmatpush1.msra.mxu0 %v115
    %155 = vmatprep.subr.mxu0 0.0
    %156 = vmatpush1.msra.mxu0 0.0
    %157 = vmatprep.subr.mxu0 0.0
    %158 = vmatpush1.msra.mxu0 0.0
    %159 = vmatprep.subr.mxu0 0.0
    %160 = vmatpush1.msra.mxu0 0.0
    %161 = vmatprep.subr.mxu0 0.0
    %162 = vmatpush1.msra.mxu0 0.0
    %163 = vmatprep.subr.mxu0 0.0
    %164 = vmatpush1.msra.mxu0 0.0
    %165 = vmatprep.subr.mxu0 0.0
    %166 = vmatpush1.msra.mxu0 0.0
    %167 = vmatprep.subr.mxu0 0.0
    %168 = vmatpush1.msra.mxu0 0.0
    %169 = vmatprep.subr.mxu0 0.0
    %170 = vmatpush1.msra.mxu0 0.0
    %171 = vmatprep.subr.mxu0 0.0
    %172 = vmatpush1.msra.mxu0 0.0
    %173 = vmatprep.subr.mxu0 0.0
    %174 = vmatpush1.msra.mxu0 0.0
    %175 = vmatprep.subr.mxu0 0.0
    %176 = vmatpush1.msra.mxu0 0.0
    %177 = vmatprep.subr.mxu0 0.0
    %178 = vmatpush1.msra.mxu0 0.0
    %179 = vmatprep.subr.mxu0 0.0
    %180 = vmatpush1.msra.mxu0 0.0
    %181 = vmatprep.subr.mxu0 0.0
    %182 = vmatpush1.msra.mxu0 0.0
    %183 = vmatprep.subr.mxu0 0.0
    %184 = vmatpush1.msra.mxu0 0.0
    %185 = vmatprep.subr.mxu0 0.0
    %186 = vmatpush1.msra.mxu0 0.0
    %187 = vmatprep.mubr.f32.mxu0 0.0
    %188 = vmatmul.mubr.f32.gmra.mrb[0].mxu0 %v99
    %v189 = vpop.f32.mrb[0].mxu0
    %v190 = vadd.f32 %v121, %v189
    %v191 = vpop.f32.mrb[0].mxu0
    %192 = vdwg.mxu0
    %v193 = vmax.f32 %v190, 0.0
    %v194 = vld [vmem:[#allocation7] sm:$0xff]
    %v195 = vld [vmem:[#allocation7 + $0x8] sm:$0xff]
    %v196 = vld [vmem:[#allocation7 + $0x10] sm:$0xff]
    %v197 = vld [vmem:[#allocation7 + $0x18] sm:$0xff]
    %v198 = vld [vmem:[#allocation7 + $0x20] sm:$0xff]
    %v199 = vld [vmem:[#allocation7 + $0x28] sm:$0xff]
    %v200 = vld [vmem:[#allocation7 + $0x30] sm:$0xff]
    %v201 = vld [vmem:[#allocation7 + $0x38] sm:$0xff]
    %v202 = vld [vmem:[#allocation7 + $0x40] sm:$0xff]
    %v203 = vld [vmem:[#allocation7 + $0x48] sm:$0xff]
    %v204 = vld [vmem:[#allocation7 + $0x50] sm:$0xff]
    %v205 = vld [vmem:[#allocation7 + $0x58] sm:$0xff]
    %v206 = vld [vmem:[#allocation7 + $0x60] sm:$0xff]
    %v207 = vld [vmem:[#allocation7 + $0x68] sm:$0xff]
    %v208 = vld [vmem:[#allocation7 + $0x70] sm:$0xff]
    %v209 = vld [vmem:[#allocation7 + $0x78] sm:$0xff]
    %v210 = vld [vmem:[%s4] sm:$0x1]
    %v212 = vlaneseq
    %v213 = vshrl.u32 %v212, 7
    %v214 = vsub.s32 0, %v213
    %v215 = vrot.slane %v210, %v214
    %217 = vmatprep.subr.mxu0 0.0
    %218 = vmatpush1.msra.mxu0 %v194
    %219 = vmatprep.subr.mxu0 0.0
    %220 = vmatpush1.msra.mxu0 %v195
    %221 = vmatprep.subr.mxu0 0.0
    %222 = vmatpush1.msra.mxu0 %v196
    %223 = vmatprep.subr.mxu0 0.0
    %224 = vmatpush1.msra.mxu0 %v197
    %225 = vmatprep.subr.mxu0 0.0
    %226 = vmatpush1.msra.mxu0 %v198
    %227 = vmatprep.subr.mxu0 0.0
    %228 = vmatpush1.msra.mxu0 %v199
    %229 = vmatprep.subr.mxu0 0.0
    %230 = vmatpush1.msra.mxu0 %v200
    %231 = vmatprep.subr.mxu0 0.0
    %232 = vmatpush1.msra.mxu0 %v201
    %233 = vmatprep.subr.mxu0 0.0
    %234 = vmatpush1.msra.mxu0 %v202
    %235 = vmatprep.subr.mxu0 0.0
    %236 = vmatpush1.msra.mxu0 %v203
    %237 = vmatprep.subr.mxu0 0.0
    %238 = vmatpush1.msra.mxu0 %v204
    %239 = vmatprep.subr.mxu0 0.0
    %240 = vmatpush1.msra.mxu0 %v205
    %241 = vmatprep.subr.mxu0 0.0
    %242 = vmatpush1.msra.mxu0 %v206
    %243 = vmatprep.subr.mxu0 0.0
    %244 = vmatpush1.msra.mxu0 %v207
    %245 = vmatprep.subr.mxu0 0.0
    %246 = vmatpush1.msra.mxu0 %v208
    %247 = vmatprep.subr.mxu0 0.0
    %248 = vmatpush1.msra.mxu0 %v209
    %249 = vmatprep.subr.mxu0 0.0
    %250 = vmatpush1.msra.mxu0 0.0
    %251 = vmatprep.subr.mxu0 0.0
    %252 = vmatpush1.msra.mxu0 0.0
    %253 = vmatprep.subr.mxu0 0.0
    %254 = vmatpush1.msra.mxu0 0.0
    %255 = vmatprep.subr.mxu0 0.0
    %256 = vmatpush1.msra.mxu0 0.0
    %257 = vmatprep.subr.mxu0 0.0
    %258 = vmatpush1.msra.mxu0 0.0
    %259 = vmatprep.subr.mxu0 0.0
    %260 = vmatpush1.msra.mxu0 0.0
    %261 = vmatprep.subr.mxu0 0.0
    %262 = vmatpush1.msra.mxu0 0.0
    %263 = vmatprep.subr.mxu0 0.0
    %264 = vmatpush1.msra.mxu0 0.0
    %265 = vmatprep.subr.mxu0 0.0
    %266 = vmatpush1.msra.mxu0 0.0
    %267 = vmatprep.subr.mxu0 0.0
    %268 = vmatpush1.msra.mxu0 0.0
    %269 = vmatprep.subr.mxu0 0.0
    %270 = vmatpush1.msra.mxu0 0.0
    %271 = vmatprep.subr.mxu0 0.0
    %272 = vmatpush1.msra.mxu0 0.0
    %273 = vmatprep.subr.mxu0 0.0
    %274 = vmatpush1.msra.mxu0 0.0
    %275 = vmatprep.subr.mxu0 0.0
    %276 = vmatpush1.msra.mxu0 0.0
    %277 = vmatprep.subr.mxu0 0.0
    %278 = vmatpush1.msra.mxu0 0.0
    %279 = vmatprep.subr.mxu0 0.0
    %280 = vmatpush1.msra.mxu0 0.0
    %281 = vmatprep.mubr.f32.mxu0 0.0
    %282 = vmatmul.mubr.f32.gmra.mrb[0].mxu0 %v193
    %v283 = vpop.f32.mrb[0].mxu0
    %v284 = vadd.f32 %v215, %v283
    %v285 = vpop.f32.mrb[0].mxu0
    %286 = vdwg.mxu0
    %v287 = vmax.f32 %v284, 0.0
    %v288 = vld [vmem:[#allocation8] sm:$0xff]
    %v289 = vld [vmem:[#allocation8 + $0x8] sm:$0xff]
    %v290 = vld [vmem:[#allocation8 + $0x10] sm:$0xff]
    %v291 = vld [vmem:[#allocation8 + $0x18] sm:$0xff]
    %v292 = vld [vmem:[#allocation8 + $0x20] sm:$0xff]
    %v293 = vld [vmem:[#allocation8 + $0x28] sm:$0xff]
    %v294 = vld [vmem:[#allocation8 + $0x30] sm:$0xff]
    %v295 = vld [vmem:[#allocation8 + $0x38] sm:$0xff]
    %v296 = vld [vmem:[#allocation8 + $0x40] sm:$0xff]
    %v297 = vld [vmem:[#allocation8 + $0x48] sm:$0xff]
    %v298 = vld [vmem:[#allocation8 + $0x50] sm:$0xff]
    %v299 = vld [vmem:[#allocation8 + $0x58] sm:$0xff]
    %v300 = vld [vmem:[#allocation8 + $0x60] sm:$0xff]
    %v301 = vld [vmem:[#allocation8 + $0x68] sm:$0xff]
    %v302 = vld [vmem:[#allocation8 + $0x70] sm:$0xff]
    %v303 = vld [vmem:[#allocation8 + $0x78] sm:$0xff]
    %v304 = vld [vmem:[%s6] sm:$0x1]
    %v306 = vlaneseq
    %v307 = vshrl.u32 %v306, 7
    %v308 = vsub.s32 0, %v307
    %v309 = vrot.slane %v304, %v308
    %311 = vmatprep.subr.mxu0 0.0
    %312 = vmatpush1.msra.mxu0 %v288
    %313 = vmatprep.subr.mxu0 0.0
    %314 = vmatpush1.msra.mxu0 %v289
    %315 = vmatprep.subr.mxu0 0.0
    %316 = vmatpush1.msra.mxu0 %v290
    %317 = vmatprep.subr.mxu0 0.0
    %318 = vmatpush1.msra.mxu0 %v291
    %319 = vmatprep.subr.mxu0 0.0
    %320 = vmatpush1.msra.mxu0 %v292
    %321 = vmatprep.subr.mxu0 0.0
    %322 = vmatpush1.msra.mxu0 %v293
    %323 = vmatprep.subr.mxu0 0.0
    %324 = vmatpush1.msra.mxu0 %v294
    %325 = vmatprep.subr.mxu0 0.0
    %326 = vmatpush1.msra.mxu0 %v295
    %327 = vmatprep.subr.mxu0 0.0
    %328 = vmatpush1.msra.mxu0 %v296
    %329 = vmatprep.subr.mxu0 0.0
    %330 = vmatpush1.msra.mxu0 %v297
    %331 = vmatprep.subr.mxu0 0.0
    %332 = vmatpush1.msra.mxu0 %v298
    %333 = vmatprep.subr.mxu0 0.0
    %334 = vmatpush1.msra.mxu0 %v299
    %335 = vmatprep.subr.mxu0 0.0
    %336 = vmatpush1.msra.mxu0 %v300
    %337 = vmatprep.subr.mxu0 0.0
    %338 = vmatpush1.msra.mxu0 %v301
    %339 = vmatprep.subr.mxu0 0.0
    %340 = vmatpush1.msra.mxu0 %v302
    %341 = vmatprep.subr.mxu0 0.0
    %342 = vmatpush1.msra.mxu0 %v303
    %343 = vmatprep.subr.mxu0 0.0
    %344 = vmatpush1.msra.mxu0 0.0
    %345 = vmatprep.subr.mxu0 0.0
    %346 = vmatpush1.msra.mxu0 0.0
    %347 = vmatprep.subr.mxu0 0.0
    %348 = vmatpush1.msra.mxu0 0.0
    %349 = vmatprep.subr.mxu0 0.0
    %350 = vmatpush1.msra.mxu0 0.0
    %351 = vmatprep.subr.mxu0 0.0
    %352 = vmatpush1.msra.mxu0 0.0
    %353 = vmatprep.subr.mxu0 0.0
    %354 = vmatpush1.msra.mxu0 0.0
    %355 = vmatprep.subr.mxu0 0.0
    %356 = vmatpush1.msra.mxu0 0.0
    %357 = vmatprep.subr.mxu0 0.0
    %358 = vmatpush1.msra.mxu0 0.0
    %359 = vmatprep.subr.mxu0 0.0
    %360 = vmatpush1.msra.mxu0 0.0
    %361 = vmatprep.subr.mxu0 0.0
    %362 = vmatpush1.msra.mxu0 0.0
    %363 = vmatprep.subr.mxu0 0.0
    %364 = vmatpush1.msra.mxu0 0.0
    %365 = vmatprep.subr.mxu0 0.0
    %366 = vmatpush1.msra.mxu0 0.0
    %367 = vmatprep.subr.mxu0 0.0
    %368 = vmatpush1.msra.mxu0 0.0
    %369 = vmatprep.subr.mxu0 0.0
    %370 = vmatpush1.msra.mxu0 0.0
    %371 = vmatprep.subr.mxu0 0.0
    %372 = vmatpush1.msra.mxu0 0.0
    %373 = vmatprep.subr.mxu0 0.0
    %374 = vmatpush1.msra.mxu0 0.0
    %375 = vmatprep.mubr.f32.mxu0 0.0
    %376 = vmatmul.mubr.f32.gmra.mrb[0].mxu0 %v287
    %v377 = vpop.f32.mrb[0].mxu0
    %v378 = vadd.f32 %v309, %v377
    %v379 = vpop.f32.mrb[0].mxu0
    %380 = vdwg.mxu0
    %v381 = vsub.f32 0.0, %v378
    %v382 = vmul.f32 %v381, 1.442695
    %v383 = vpow.pop %v382
    %v384 = vadd.f32 %v383, 1.0
    %v385 = vrcp.pop %v384
    %v386 = vld [vmem:[#allocation10] sm:$0xff]
    %v387 = vld [vmem:[#allocation10 + $0x8] sm:$0xff]
    %v388 = vld [vmem:[#allocation10 + $0x10] sm:$0xff]
    %v389 = vld [vmem:[#allocation10 + $0x18] sm:$0xff]
    %v390 = vld [vmem:[#allocation10 + $0x20] sm:$0xff]
    %v391 = vld [vmem:[#allocation10 + $0x28] sm:$0xff]
    %v392 = vld [vmem:[#allocation10 + $0x30] sm:$0xff]
    %v393 = vld [vmem:[#allocation10 + $0x38] sm:$0xff]
    %v394 = vld [vmem:[#allocation10 + $0x40] sm:$0xff]
    %v395 = vld [vmem:[#allocation10 + $0x48] sm:$0xff]
    %v396 = vld [vmem:[#allocation10 + $0x50] sm:$0xff]
    %v397 = vld [vmem:[#allocation10 + $0x58] sm:$0xff]
    %v398 = vld [vmem:[#allocation10 + $0x60] sm:$0xff]
    %v399 = vld [vmem:[#allocation10 + $0x68] sm:$0xff]
    %v400 = vld [vmem:[#allocation10 + $0x70] sm:$0xff]
    %v401 = vld [vmem:[#allocation10 + $0x78] sm:$0xff]
    %v402 = vld [vmem:[%s8] sm:$0x1]
    %v404 = vlaneseq
    %v405 = vshrl.u32 %v404, 7
    %v406 = vsub.s32 0, %v405
    %v407 = vrot.slane %v402, %v406
    %409 = vmatprep.subr.mxu0 0.0
    %410 = vmatpush1.msra.mxu0 %v386
    %411 = vmatprep.subr.mxu0 0.0
    %412 = vmatpush1.msra.mxu0 %v387
    %413 = vmatprep.subr.mxu0 0.0
    %414 = vmatpush1.msra.mxu0 %v388
    %415 = vmatprep.subr.mxu0 0.0
    %416 = vmatpush1.msra.mxu0 %v389
    %417 = vmatprep.subr.mxu0 0.0
    %418 = vmatpush1.msra.mxu0 %v390
    %419 = vmatprep.subr.mxu0 0.0
    %420 = vmatpush1.msra.mxu0 %v391
    %421 = vmatprep.subr.mxu0 0.0
    %422 = vmatpush1.msra.mxu0 %v392
    %423 = vmatprep.subr.mxu0 0.0
    %424 = vmatpush1.msra.mxu0 %v393
    %425 = vmatprep.subr.mxu0 0.0
    %426 = vmatpush1.msra.mxu0 %v394
    %427 = vmatprep.subr.mxu0 0.0
    %428 = vmatpush1.msra.mxu0 %v395
    %429 = vmatprep.subr.mxu0 0.0
    %430 = vmatpush1.msra.mxu0 %v396
    %431 = vmatprep.subr.mxu0 0.0
    %432 = vmatpush1.msra.mxu0 %v397
    %433 = vmatprep.subr.mxu0 0.0
    %434 = vmatpush1.msra.mxu0 %v398
    %435 = vmatprep.subr.mxu0 0.0
    %436 = vmatpush1.msra.mxu0 %v399
    %437 = vmatprep.subr.mxu0 0.0
    %438 = vmatpush1.msra.mxu0 %v400
    %439 = vmatprep.subr.mxu0 0.0
    %440 = vmatpush1.msra.mxu0 %v401
    %441 = vmatprep.subr.mxu0 0.0
    %442 = vmatpush1.msra.mxu0 0.0
    %443 = vmatprep.subr.mxu0 0.0
    %444 = vmatpush1.msra.mxu0 0.0
    %445 = vmatprep.subr.mxu0 0.0
    %446 = vmatpush1.msra.mxu0 0.0
    %447 = vmatprep.subr.mxu0 0.0
    %448 = vmatpush1.msra.mxu0 0.0
    %449 = vmatprep.subr.mxu0 0.0
    %450 = vmatpush1.msra.mxu0 0.0
    %451 = vmatprep.subr.mxu0 0.0
    %452 = vmatpush1.msra.mxu0 0.0
    %453 = vmatprep.subr.mxu0 0.0
    %454 = vmatpush1.msra.mxu0 0.0
    %455 = vmatprep.subr.mxu0 0.0
    %456 = vmatpush1.msra.mxu0 0.0
    %457 = vmatprep.subr.mxu0 0.0
    %458 = vmatpush1.msra.mxu0 0.0
    %459 = vmatprep.subr.mxu0 0.0
    %460 = vmatpush1.msra.mxu0 0.0
    %461 = vmatprep.subr.mxu0 0.0
    %462 = vmatpush1.msra.mxu0 0.0
    %463 = vmatprep.subr.mxu0 0.0
    %464 = vmatpush1.msra.mxu0 0.0
    %465 = vmatprep.subr.mxu0 0.0
    %466 = vmatpush1.msra.mxu0 0.0
    %467 = vmatprep.subr.mxu0 0.0
    %468 = vmatpush1.msra.mxu0 0.0
    %469 = vmatprep.subr.mxu0 0.0
    %470 = vmatpush1.msra.mxu0 0.0
    %471 = vmatprep.subr.mxu0 0.0
    %472 = vmatpush1.msra.mxu0 0.0
    %473 = vmatprep.mubr.f32.mxu0 0.0
    %474 = vmatmul.mubr.f32.gmra.mrb[0].mxu0 %v385
    %v475 = vpop.f32.mrb[0].mxu0
    %v476 = vadd.f32 %v407, %v475
    %v477 = vpop.f32.mrb[0].mxu0
    %478 = vdwg.mxu0
    %479 = vst [vmem:[#allocation11] sm:$0xff] %v476
    // Predicated region
    $region58: #{tpu_custom_call.1} parent=1 // pred_check
      _
    $region59: #{tpu_custom_call.1} parent=1 // pred_check_branch
      %481 = sbr.rel (0) target = $region61
    $region60: #{tpu_custom_call.1} parent=1 // pred_region
      %s483 = ssub.s32 128, 128
      %484 = vsyncadd [#allocation4], %s483
      %s486 = sshll.u32 [#allocation11], 4
      %s487 = int_to_ptr.vmem [resolvable:$true] %s486
      %489 = dma.vmem_to_hbm [thread:$0]  %s487, 128, %s9, [#allocation4]
    $region61: #{tpu_custom_call.1} parent=1 // pred_fallthru
      _
    // Predicated region
    $region62: #{tpu_custom_call.1} parent=1 // pred_check
      _
    $region63: #{tpu_custom_call.1} parent=1 // pred_check_branch
      %491 = sbr.rel (0) target = $region65
    $region64: #{tpu_custom_call.1} parent=1 // pred_region
      %492 = dma.done [#allocation4], 128
    $region65: #{tpu_custom_call.1} parent=1 // pred_fallthru
      _
    %493 = vsyncpa [#allocation3], 1
    %494 = vsyncpa [#allocation6], 1
    %495 = vsyncpa [#allocation9], 1
    %496 = vsyncpa [#allocation4], 1

</llo_original>
